<compile_context>
chip_gen: v7x
topology: tpu7x:2x2x1
jax: 0.10.0
libtpu: 0.0.40
codegen_flags: <defaults>
</compile_context>

<pallas_src>
import jax
import jax.numpy as jnp
from jax.experimental import pallas as pl
from jax.experimental.pallas import tpu as pltpu

IN_FEATURES = 512
_LANE = 128
# Max N-tile width (columns).  int8 weight tile at TN=2048 is 1 MiB (2 MiB double
# buffered); together with the in-kernel f32/bf16 dequant temporaries the worst-case
# VMEM footprint stays well under the scoped limits on v5e/v6e/v7x.
_TN_MAX = 2048


# ----------------------------------------------------------------------------- kernel
def _gamma_beta_linear_kernel(x_ref, wq_ref, s_ref, b_ref, o_ref):
    """One grid step: y[:, j*TN:(j+1)*TN] = (x @ dequant(Wq_tile)) * scale + bias."""
    # Activation cast happens in-kernel (tiny (B,512) tile, VPU has huge slack).
    x = x_ref[...].astype(jnp.bfloat16)
    # int8 -> f32 -> bf16: exact for |q| <= 127, guaranteed lowering, hidden under DMA.
    w = wq_ref[...].astype(jnp.float32).astype(jnp.bfloat16)
    acc = jnp.dot(x, w, preferred_element_type=jnp.float32)      # f32 MXU accumulation
    # Per-column dequant scale applied on the small (B, TN) accumulator, then bias.
    o_ref[...] = (acc * s_ref[...] + b_ref[...]).astype(o_ref.dtype)


# ------------------------------------------------------------------------ tile picking
def _round_up(x, m):
    return ((x + m - 1) // m) * m


def _pick_tile_n(n_pad):
    """Pick TN: a divisor of n_pad, 128-granular, <= _TN_MAX, and (when possible)
    yielding >= 2 grid steps so v7x's two TensorCores both get weight tiles."""
    assert n_pad % _LANE == 0
    m = n_pad // _LANE
    min_tiles = 2 if m >= 2 else 1
    best = _LANE
    for d in range(1, m + 1):
        if m % d == 0:
            tn = d * _LANE
            if tn <= _TN_MAX and (m // d) >= min_tiles:
                best = max(best, tn)
    return best


# -------------------------------------------------------------------- parameter prep
def prepare_gamma_beta_params(w_torch_layout, b_vec):
    """One-time parameter prep (never per forward call).

    w_torch_layout: (2*D, 512) -- PyTorch nn.Linear weight layout.
    b_vec:          (2*D,)     -- PyTorch nn.Linear bias.

    Layout: columns are [gamma(D) | pad to D_pad | beta(D) | pad to D_pad] so the
    gamma/beta split in the wrapper is lane-tile aligned.  Weights are quantized to
    int8 with per-column f32 scales (the kernel dequantizes in-VMEM).
    """
    two_d, k = w_torch_layout.shape
    assert k == IN_FEATURES and two_d % 2 == 0
    d = two_d // 2
    d_pad = _round_up(d, _LANE)
    n_pad = 2 * d_pad

    wt = jnp.transpose(w_torch_layout).astype(jnp.float32)       # (512, 2D), once
    w_gamma = jnp.pad(wt[:, :d], ((0, 0), (0, d_pad - d)))       # (512, D_pad)
    w_beta = jnp.pad(wt[:, d:], ((0, 0), (0, d_pad - d)))        # (512, D_pad)
    w_full = jnp.concatenate([w_gamma, w_beta], axis=1)          # (512, n_pad)

    b_gamma = jnp.pad(b_vec[:d].astype(jnp.float32), (0, d_pad - d))
    b_beta = jnp.pad(b_vec[d:].astype(jnp.float32), (0, d_pad - d))
    b_full = jnp.concatenate([b_gamma, b_beta], axis=0)          # (n_pad,)

    # Per-column symmetric int8 quantization.
    amax = jnp.max(jnp.abs(w_full), axis=0)                      # (n_pad,)
    scale = jnp.where(amax > 0.0, amax / 127.0, 1.0).astype(jnp.float32)
    w_q = jnp.clip(jnp.round(w_full / scale[None, :]), -127.0, 127.0).astype(jnp.int8)

    tn = _pick_tile_n(n_pad)
    return {
        "w_q": w_q,                                   # (512, n_pad) int8
        "scale": scale.reshape(1, n_pad),             # (1, n_pad) f32
        "bias": b_full.reshape(1, n_pad),             # (1, n_pad) f32
        "tn": tn,
        "n_pad": n_pad,
        "d_pad": d_pad,
        "output_dim": d,
    }


# ------------------------------------------------------------------------ forward path
def gamma_beta_linear(x, params):
    """x: (B, 512) f32 -> (B, n_pad) f32 ( = x @ W + b with lane-aligned column layout)."""
    B, K = x.shape
    assert K == IN_FEATURES
    w_q, scale, bias = params["w_q"], params["scale"], params["bias"]
    n_pad, tn = params["n_pad"], params["tn"]
    assert w_q.shape == (IN_FEATURES, n_pad) and n_pad % tn == 0
    grid = (n_pad // tn,)

    # Explicit VMEM budget: double-buffered int8 weight tiles + in-kernel dequant
    # temporaries (f32 + bf16 copies of one tile) + resident x + scale/bias/out tiles.
    vmem_est = (2 * IN_FEATURES * tn * 1          # int8 weight tiles (double-buffered)
                + IN_FEATURES * tn * 4            # f32 dequant temp (worst case)
                + IN_FEATURES * tn * 2            # bf16 MXU operand
                + 2 * B * IN_FEATURES * 4         # resident x
                + 2 * 2 * tn * 4                  # scale + bias tiles
                + 2 * B * tn * 4)                 # out tiles
    vmem_limit = min(max(2 * vmem_est + (2 << 20), 16 << 20), 96 << 20)

    cost = pl.CostEstimate(
        flops=2 * B * IN_FEATURES * n_pad,
        transcendentals=0,
        bytes_accessed=(B * IN_FEATURES * 4           # x (f32)
                        + IN_FEATURES * n_pad * 1     # int8 weights (dominant stream)
                        + 2 * n_pad * 4               # scale + bias
                        + B * n_pad * 4),             # out
    )

    return pl.pallas_call(
        _gamma_beta_linear_kernel,
        out_shape=jax.ShapeDtypeStruct((B, n_pad), jnp.float32),
        grid=grid,
        in_specs=[
            pl.BlockSpec((B, IN_FEATURES), lambda j: (0, 0)),   # x stays resident
            pl.BlockSpec((IN_FEATURES, tn), lambda j: (0, j)),  # int8 weights, pipelined
            pl.BlockSpec((1, tn), lambda j: (0, j)),            # per-column scales
            pl.BlockSpec((1, tn), lambda j: (0, j)),            # bias
        ],
        out_specs=pl.BlockSpec((B, tn), lambda j: (0, j)),
        compiler_params=pltpu.CompilerParams(
            dimension_semantics=("parallel",),   # >=2 tiles whenever possible -> v7x 2-TC
            vmem_limit_bytes=vmem_limit,
        ),
        cost_estimate=cost,
    )(x, w_q, scale, bias)


def gamma_beta_forward(noise_level_encoding, params):
    """Full GammaBeta forward: returns (gamma, beta), each (B, output_dim, 1) float32."""
    y = gamma_beta_linear(noise_level_encoding, params)   # (B, n_pad) f32
    d, d_pad = params["output_dim"], params["d_pad"]
    # Lane-aligned split (gamma block starts at 0, beta block at d_pad); the trailing
    # unsqueeze(-1) matches the PyTorch module's return shapes.
    gamma = y[:, :d, None]
    beta = y[:, d_pad:d_pad + d, None]
    return gamma, beta


# ------------------------------------------------------------------------------- demo
if __name__ == "__main__":
    B = 2
    output_dim = 32   # small synthetic output_dim -> 2*D = 64; each half pads to 128 lanes

    key = jax.random.PRNGKey(0)
    k_x, k_w, k_b = jax.random.split(key, 3)

    # PyTorch Linear default init: uniform(-1/sqrt(512), 1/sqrt(512)), weight (2*D, 512).
    bound = 1.0 / jnp.sqrt(jnp.float32(IN_FEATURES))
    w_torch_layout = jax.random.uniform(
        k_w, (2 * output_dim, IN_FEATURES), jnp.float32, -bound, bound)
    b_vec = jax.random.uniform(k_b, (2 * output_dim,), jnp.float32, -bound, bound)
    x = jax.random.normal(k_x, (B, IN_FEATURES), jnp.float32)

    # One-time parameter prep (transpose + lane-pad per half + int8 quantization).
    params = prepare_gamma_beta_params(w_torch_layout, b_vec)

    gamma, beta = gamma_beta_forward(x, params)
    gamma = jax.block_until_ready(gamma)
    beta = jax.block_until_ready(beta)

    # --- Reference 1 (tight): same rounded values the kernel sees (bf16 x, int8 w,
    # scale applied after the dot), f32 accumulation.
    x_bf = x.astype(jnp.bfloat16).astype(jnp.float32)
    wq_f32 = params["w_q"].astype(jnp.float32)
    ref = (jnp.dot(x_bf, wq_f32, precision=jax.lax.Precision.HIGHEST)
           * params["scale"] + params["bias"])                       # (B, n_pad)
    d_pad = params["d_pad"]
    ref_gamma_q = ref[:, :output_dim, None]
    ref_beta_q = ref[:, d_pad:d_pad + output_dim, None]

    # --- Reference 2 (loose): full-precision PyTorch-equivalent math, to bound the
    # intentional bf16-activation + int8-weight quantization error.
    ref_fp = jnp.dot(x, jnp.transpose(w_torch_layout),
                     precision=jax.lax.Precision.HIGHEST) + b_vec[None, :]
    ref_gamma_fp = ref_fp[:, :output_dim, None]
    ref_beta_fp = ref_fp[:, output_dim:, None]

    assert gamma.shape == (B, output_dim, 1)
    assert beta.shape == (B, output_dim, 1)
    assert jnp.allclose(gamma, ref_gamma_q, atol=1e-3, rtol=1e-3)
    assert jnp.allclose(beta, ref_beta_q, atol=1e-3, rtol=1e-3)
    assert jnp.allclose(gamma, ref_gamma_fp, atol=5e-2, rtol=5e-2)
    assert jnp.allclose(beta, ref_beta_fp, atol=5e-2, rtol=5e-2)

    print("KERNEL_OK")
</pallas_src>

<mosaic_0001>
module attributes {stable_mosaic.version = 11 : i64} {
  func.func @_gamma_beta_linear_kernel(%arg0: i32, %arg1: memref<2x512xf32, #tpu.memory_space<vmem>>, %arg2: memref<512x128xi8, #tpu.memory_space<vmem>>, %arg3: memref<1x128xf32, #tpu.memory_space<vmem>>, %arg4: memref<1x128xf32, #tpu.memory_space<vmem>>, %arg5: memref<2x128xf32, #tpu.memory_space<vmem>>) attributes {dimension_semantics = [#tpu.dimension_semantics<parallel>], iteration_bounds = array<i64: 2>, scalar_prefetch = 0 : i64, scratch_operands = 0 : i64, tpu.core_type = #tpu.core_type<tc>, window_params = [{pipeline_mode = #tpu.pipeline_mode<synchronous>, transform_indices = @transform_0, window_bounds = array<i64: 2, 512>}, {transform_indices = @transform_1, window_bounds = array<i64: 512, 128>}, {transform_indices = @transform_2, window_bounds = array<i64: 1, 128>}, {transform_indices = @transform_3, window_bounds = array<i64: 1, 128>}, {transform_indices = @transform_4, window_bounds = array<i64: 2, 128>}]} {
    %c0 = arith.constant 0 : index
    %c0_0 = arith.constant 0 : index
    %0 = vector.load %arg1[%c0, %c0_0] : memref<2x512xf32, #tpu.memory_space<vmem>>, vector<2x512xf32>
    %1 = arith.truncf %0 : vector<2x512xf32> to vector<2x512xbf16>
    %c0_1 = arith.constant 0 : index
    %c0_2 = arith.constant 0 : index
    %2 = vector.load %arg2[%c0_1, %c0_2] : memref<512x128xi8, #tpu.memory_space<vmem>>, vector<512x128xi8>
    %3 = arith.sitofp %2 : vector<512x128xi8> to vector<512x128xf32>
    %4 = arith.truncf %3 : vector<512x128xf32> to vector<512x128xbf16>
    %cst = arith.constant dense<0.000000e+00> : vector<2x128xf32>
    %5 = tpu.matmul %1, %4, %cst {dimension_numbers = #tpu.dot_dimension_numbers<[1], [0], [0], [1], [0, 0, 1, 1], [], []>} : vector<2x512xbf16>, vector<512x128xbf16>, vector<2x128xf32> -> vector<2x128xf32>
    %c0_3 = arith.constant 0 : index
    %c0_4 = arith.constant 0 : index
    %6 = vector.load %arg3[%c0_3, %c0_4] : memref<1x128xf32, #tpu.memory_space<vmem>>, vector<1x128xf32>
    %7 = vector.broadcast %6 : vector<1x128xf32> to vector<2x128xf32>
    %8 = arith.mulf %5, %7 : vector<2x128xf32>
    %c0_5 = arith.constant 0 : index
    %c0_6 = arith.constant 0 : index
    %9 = vector.load %arg4[%c0_5, %c0_6] : memref<1x128xf32, #tpu.memory_space<vmem>>, vector<1x128xf32>
    %10 = vector.broadcast %9 : vector<1x128xf32> to vector<2x128xf32>
    %11 = arith.addf %8, %10 : vector<2x128xf32>
    %c0_7 = arith.constant 0 : index
    %c0_8 = arith.constant 0 : index
    %12 = vector.load %arg5[%c0_7, %c0_8] : memref<2x128xf32, #tpu.memory_space<vmem>>, vector<2x128xf32>
    tpu.vector_store %arg5[%c0_7, %c0_8], %11 {strides = array<i32>} : memref<2x128xf32, #tpu.memory_space<vmem>>, vector<2x128xf32>,
    return
  }
  func.func @transform_0(%arg0: i32) -> (i32, i32) {
    %c0_i32 = arith.constant 0 : i32
    %c0_i32_0 = arith.constant 0 : i32
    %c0_i32_1 = arith.constant 0 : i32
    return %c0_i32, %c0_i32_0 : i32, i32
  }
  func.func @transform_1(%arg0: i32) -> (i32, i32) {
    %c0_i32 = arith.constant 0 : i32
    %c0_i32_0 = arith.constant 0 : i32
    return %c0_i32, %arg0 : i32, i32
  }
  func.func @transform_2(%arg0: i32) -> (i32, i32) {
    %c0_i32 = arith.constant 0 : i32
    %c0_i32_0 = arith.constant 0 : i32
    return %c0_i32, %arg0 : i32, i32
  }
  func.func @transform_3(%arg0: i32) -> (i32, i32) {
    %c0_i32 = arith.constant 0 : i32
    %c0_i32_0 = arith.constant 0 : i32
    return %c0_i32, %arg0 : i32, i32
  }
  func.func @transform_4(%arg0: i32) -> (i32, i32) {
    %c0_i32 = arith.constant 0 : i32
    %c0_i32_0 = arith.constant 0 : i32
    return %c0_i32, %arg0 : i32, i32
  }
}

</mosaic_0001>

<llo_original>
// kernel: tpu_custom_call.1
$region0: #{tpu_custom_call.1}
  #allocation0 [shape = 'u32[]', space=smem, size = 0x4, offset = 0x4, fixed_abs, tag = 'smem constant byte address 0x4 - core index']
  #allocation1 [shape = 'u32[144,128]{1,0:T(1,128)}', space=vmem, size = 0x12000, scoped, tag = 'internal scratch']
  %s0 = inlined_call_operand.hbm [shape: f32[2,512], index: 0, kind: input, shape index: {}]
  %s1 = inlined_call_operand.hbm [shape: s8[512,256], index: 1, kind: input, shape index: {}]
  %s2 = inlined_call_operand.vmem [shape: f32[1,256], index: 2, kind: input, shape index: {}]
  %s3 = inlined_call_operand.vmem [shape: f32[1,256], index: 3, kind: input, shape index: {}]
  %s4 = inlined_call_operand.hbm [shape: f32[2,256], index: 4, kind: output, shape index: {}]
  %s5 = sld [smem:[#allocation0]]
  $region57: #{tpu_custom_call.1} parent=0
    _
  %s7 = ssub.s32 1, %s5
  %s8 = scalar_select 0, %s7, %s5
  $region1: #{tpu_custom_call.1} parent=0
    #allocation2 [shape = 'u8[4096]{0}', space=vmem, size = 0x1000, scoped, tag = 'input window, operand 0, single buffered']
    #allocation3 [shape = 's32[2]{0}', space=sflag, size = 0x8, scoped, tag = 'scoped memory for tpu_custom_call.1']
    #allocation4 [shape = 's32[2]{0}', space=sflag, size = 0x8, scoped, tag = 'scoped memory for tpu_custom_call.1']
    #allocation5 [shape = 'u8[131072]{0}', space=vmem, size = 0x20000, scoped, tag = 'input window, operand 1']
    #allocation6 [shape = 's32[2]{0}', space=sflag, size = 0x8, scoped, tag = 'scoped memory for tpu_custom_call.1']
    #allocation7 [shape = 'u8[2048]{0}', space=vmem, size = 0x800, scoped, tag = 'output window, operand 0']
    %9 = vsyncpa [#allocation3], 0
    %10 = vsyncpa [#allocation6], 0
    %s11 = scalar_lea.sflag [#allocation6], 1
    %12 = vsyncpa %s11, 0
    %13 = vsyncpa [#allocation4], 0
    %s14 = scalar_lea.sflag [#allocation4], 1
    %15 = vsyncpa %s14, 0
    loop: start=0, step=1, limit=4
    $region2: #{tpu_custom_call.1} parent=1 // loop_pre_header
      _
    $region3: #{tpu_custom_call.1} parent=1 // loop_header
      %s17 = sphi 0, %s21
      %p18 = scmp.ge.s32.totalorder %s17, 4
      %s25 = sphi 0, %s25
      %s27 = sphi 0, %s25
      %s28 = sphi 0, %s27
      %s42 = sphi 0, %s28
      %s48 = sphi 0, %s50
      %s51 = sphi 0, %s48
      %s52 = sphi 0, %s51
      %s68 = sphi 0, %s52
      %s74 = sphi 0, %s76
      %s77 = sphi 0, %s74
      %s78 = sphi 0, %s77
      %s94 = sphi 0, %s78
      %s100 = sphi 0, %s102
      %s103 = sphi 0, %s100
      %s104 = sphi 0, %s103
      %s120 = sphi 0, %s104
      %s126 = sphi 0, %s128
      %s129 = sphi 0, %s126
      %s130 = sphi 0, %s129
      %s146 = sphi 0, %s130
    $region4: #{tpu_custom_call.1} parent=1 // loop_header_branch
      %20 = sbr.rel (%p18) target = $region8
    $region5: #{tpu_custom_call.1} parent=1 // loop_body
      %s22 = ssub.s32 %s17, 1
      %s23 = ssub.s32 %s17, 2
      %s24 = sadd.s32 %s17, 1
      %s26 = sadd.s32 %s25, 1
      %p29 = scmp.eq.s32.totalorder %s17, 1
      %p30 = scmp.ne.s32.totalorder %s25, %s27
      %p31 = scmp.eq.s32.totalorder %s17, 0
      %p32 = por %p30, %p31
      %p33 = scmp.ne.s32.totalorder %s25, %s27
      %p34 = scmp.eq.s32.totalorder %s22, 1
      %p35 = por %p33, %p34
      %p36 = scmp.ne.s32.totalorder %s27, %s28
      %p37 = scmp.eq.s32.totalorder %s22, 0
      %p38 = por %p36, %p37
      %p39 = scmp.ne.s32.totalorder %s27, %s28
      %p40 = scmp.eq.s32.totalorder %s23, 1
      %p41 = por %p39, %p40
      %p43 = scmp.ne.s32.totalorder %s28, %s42
      %p44 = scmp.eq.s32.totalorder %s23, 0
      %p45 = por %p43, %p44
      %s46 = ssub.s32 %s17, %s24
      %p47 = scmp.eq.s32.totalorder %s46, 0
      %s49 = sadd.s32 %s48, 1
      %s50 = scalar_select %p47, %s48, %s49
      %p53 = pneg %p47
      %p54 = scmp.eq.s32.totalorder %s17, 1
      %p55 = por %p53, %p54
      %p56 = scmp.ne.s32.totalorder %s48, %s51
      %p57 = scmp.eq.s32.totalorder %s17, 0
      %p58 = por %p56, %p57
      %p59 = scmp.ne.s32.totalorder %s48, %s51
      %p60 = scmp.eq.s32.totalorder %s22, 1
      %p61 = por %p59, %p60
      %p62 = scmp.ne.s32.totalorder %s51, %s52
      %p63 = scmp.eq.s32.totalorder %s22, 0
      %p64 = por %p62, %p63
      %p65 = scmp.ne.s32.totalorder %s51, %s52
      %p66 = scmp.eq.s32.totalorder %s23, 1
      %p67 = por %p65, %p66
      %p69 = scmp.ne.s32.totalorder %s52, %s68
      %p70 = scmp.eq.s32.totalorder %s23, 0
      %p71 = por %p69, %p70
      %s72 = ssub.s32 %s17, %s24
      %p73 = scmp.eq.s32.totalorder %s72, 0
      %s75 = sadd.s32 %s74, 1
      %s76 = scalar_select %p73, %s74, %s75
      %p79 = pneg %p73
      %p80 = scmp.eq.s32.totalorder %s17, 1
      %p81 = por %p79, %p80
      %p82 = scmp.ne.s32.totalorder %s74, %s77
      %p83 = scmp.eq.s32.totalorder %s17, 0
      %p84 = por %p82, %p83
      %p85 = scmp.ne.s32.totalorder %s74, %s77
      %p86 = scmp.eq.s32.totalorder %s22, 1
      %p87 = por %p85, %p86
      %p88 = scmp.ne.s32.totalorder %s77, %s78
      %p89 = scmp.eq.s32.totalorder %s22, 0
      %p90 = por %p88, %p89
      %p91 = scmp.ne.s32.totalorder %s77, %s78
      %p92 = scmp.eq.s32.totalorder %s23, 1
      %p93 = por %p91, %p92
      %p95 = scmp.ne.s32.totalorder %s78, %s94
      %p96 = scmp.eq.s32.totalorder %s23, 0
      %p97 = por %p95, %p96
      %s98 = ssub.s32 %s17, %s24
      %p99 = scmp.eq.s32.totalorder %s98, 0
      %s101 = sadd.s32 %s100, 1
      %s102 = scalar_select %p99, %s100, %s101
      %p105 = pneg %p99
      %p106 = scmp.eq.s32.totalorder %s17, 1
      %p107 = por %p105, %p106
      %p108 = scmp.ne.s32.totalorder %s100, %s103
      %p109 = scmp.eq.s32.totalorder %s17, 0
      %p110 = por %p108, %p109
      %p111 = scmp.ne.s32.totalorder %s100, %s103
      %p112 = scmp.eq.s32.totalorder %s22, 1
      %p113 = por %p111, %p112
      %p114 = scmp.ne.s32.totalorder %s103, %s104
      %p115 = scmp.eq.s32.totalorder %s22, 0
      %p116 = por %p114, %p115
      %p117 = scmp.ne.s32.totalorder %s103, %s104
      %p118 = scmp.eq.s32.totalorder %s23, 1
      %p119 = por %p117, %p118
      %p121 = scmp.ne.s32.totalorder %s104, %s120
      %p122 = scmp.eq.s32.totalorder %s23, 0
      %p123 = por %p121, %p122
      %s124 = ssub.s32 %s17, %s24
      %p125 = scmp.eq.s32.totalorder %s124, 0
      %s127 = sadd.s32 %s126, 1
      %s128 = scalar_select %p125, %s126, %s127
      %p131 = pneg %p125
      %p132 = scmp.eq.s32.totalorder %s17, 1
      %p133 = por %p131, %p132
      %p134 = scmp.ne.s32.totalorder %s126, %s129
      %p135 = scmp.eq.s32.totalorder %s17, 0
      %p136 = por %p134, %p135
      %p137 = scmp.ne.s32.totalorder %s126, %s129
      %p138 = scmp.eq.s32.totalorder %s22, 1
      %p139 = por %p137, %p138
      %p140 = scmp.ne.s32.totalorder %s129, %s130
      %p141 = scmp.eq.s32.totalorder %s22, 0
      %p142 = por %p140, %p141
      %p143 = scmp.ne.s32.totalorder %s129, %s130
      %p144 = scmp.eq.s32.totalorder %s23, 1
      %p145 = por %p143, %p144
      %p147 = scmp.ne.s32.totalorder %s130, %s146
      %p148 = scmp.eq.s32.totalorder %s23, 0
      %p149 = por %p147, %p148
      %p150 = scmp.le.s32.totalorder 1, %s17
      %p151 = scmp.lt.s32.totalorder %s17, 3
      %p152 = pnand %p150, %p151
      %p153 = pneg %p152
      // Predicated region
      $region9: #{tpu_custom_call.1} parent=5 // pred_check
        _
      $region10: #{tpu_custom_call.1} parent=5 // pred_check_branch
        %155 = sbr.rel (%p152) target = $region12
      $region11: #{tpu_custom_call.1} parent=5 // pred_region
        %s156 = ssub.s32 %s17, 1
        // Predicated region
        $region13: #{tpu_custom_call.1} parent=11 // pred_check
          %p157 = pneg %p38
        $region14: #{tpu_custom_call.1} parent=11 // pred_check_branch
          %159 = sbr.rel (%p157) target = $region16
        $region15: #{tpu_custom_call.1} parent=11 // pred_region
          %s161 = ssub.s32 128, 128
          %162 = vsyncadd [#allocation3], %s161
          %s164 = sshll.u32 [#allocation2], 4
          %s165 = int_to_ptr.vmem [resolvable:$true] %s164
          %167 = dma.hbm_to_vmem [thread:$0]  %s0, 128, %s165, [#allocation3]
        $region16: #{tpu_custom_call.1} parent=11 // pred_fallthru
          _
      $region12: #{tpu_custom_call.1} parent=5 // pred_fallthru
        _
      %p168 = scmp.lt.s32.totalorder %s17, 2
      // Predicated region
      $region17: #{tpu_custom_call.1} parent=5 // pred_check
        %p169 = pneg %p168
      $region18: #{tpu_custom_call.1} parent=5 // pred_check_branch
        %171 = sbr.rel (%p169) target = $region20
      $region19: #{tpu_custom_call.1} parent=5 // pred_region
        // Predicated region
        $region21: #{tpu_custom_call.1} parent=19 // pred_check
          %p172 = pneg %p58
        $region22: #{tpu_custom_call.1} parent=19 // pred_check_branch
          %174 = sbr.rel (%p172) target = $region24
        $region23: #{tpu_custom_call.1} parent=19 // pred_region
          %s175 = sand.u32 %s48, 1
          %s176 = scalar_lea.sflag [#allocation6], %s175
          %s177 = sand.u32 %s48, 1
          %s178 = smul.addr %s177, 128
          %s179 = scalar_lea.vmem [#allocation5], %s178
          %s181 = ssub.s32 2048, 2048
          %182 = vsyncadd %s176, %s181
          %s183 = smul.addr %s17, 128
          %s184 = scalar_lea.hbm %s1, %s183
          %s185 = sshll.u32 %s179, 4
          %s186 = int_to_ptr.vmem [resolvable:$true] %s185
          %191 = dma.hbm_to_vmem [thread:$0]  %s184, 2048, %s186, %s176, 256, 128, 8
        $region24: #{tpu_custom_call.1} parent=19 // pred_fallthru
          _
        // Predicated region
        $region25: #{tpu_custom_call.1} parent=19 // pred_check
          %p192 = pneg %p84
        $region26: #{tpu_custom_call.1} parent=19 // pred_check_branch
          %194 = sbr.rel (%p192) target = $region28
        $region27: #{tpu_custom_call.1} parent=19 // pred_region
          %p195 = scmp.lt.s32.totalorder %s17, 1
          %s196 = scalar_select %p195, %s17, 1
          %s197 = scalar_lea.vmem %s2, %s196
        $region28: #{tpu_custom_call.1} parent=19 // pred_fallthru
          _
        // Predicated region
        $region29: #{tpu_custom_call.1} parent=19 // pred_check
          %p198 = pneg %p110
        $region30: #{tpu_custom_call.1} parent=19 // pred_check_branch
          %200 = sbr.rel (%p198) target = $region32
        $region31: #{tpu_custom_call.1} parent=19 // pred_region
          %p201 = scmp.lt.s32.totalorder %s17, 1
          %s202 = scalar_select %p201, %s17, 1
          %s203 = scalar_lea.vmem %s3, %s202
        $region32: #{tpu_custom_call.1} parent=19 // pred_fallthru
          _
      $region20: #{tpu_custom_call.1} parent=5 // pred_fallthru
        _
      %p204 = scmp.le.s32.totalorder 1, %s17
      %p205 = scmp.lt.s32.totalorder %s17, 3
      %p206 = pnand %p204, %p205
      %p207 = pneg %p206
      // Predicated region
      $region33: #{tpu_custom_call.1} parent=5 // pred_check
        _
      $region34: #{tpu_custom_call.1} parent=5 // pred_check_branch
        %209 = sbr.rel (%p206) target = $region36
      $region35: #{tpu_custom_call.1} parent=5 // pred_region
        %s210 = ssub.s32 %s17, 1
        // Predicated region
        $region37: #{tpu_custom_call.1} parent=35 // pred_check
          %p211 = pneg %p38
        $region38: #{tpu_custom_call.1} parent=35 // pred_check_branch
          %213 = sbr.rel (%p211) target = $region40
        $region39: #{tpu_custom_call.1} parent=35 // pred_region
          %214 = dma.done [#allocation3], 128
        $region40: #{tpu_custom_call.1} parent=35 // pred_fallthru
          _
        %s215 = sand.u32 %s51, 1
        %s216 = scalar_lea.sflag [#allocation6], %s215
        %s217 = sand.u32 %s51, 1
        %s218 = smul.addr %s217, 128
        %s219 = scalar_lea.vmem [#allocation5], %s218
        // Predicated region
        $region41: #{tpu_custom_call.1} parent=35 // pred_check
          %p220 = pneg %p64
        $region42: #{tpu_custom_call.1} parent=35 // pred_check_branch
          %222 = sbr.rel (%p220) target = $region44
        $region43: #{tpu_custom_call.1} parent=35 // pred_region
          %223 = dma.done %s216, 2048
        $region44: #{tpu_custom_call.1} parent=35 // pred_fallthru
          _
        %p224 = pneg %p38
        %p225 = pneg %p35
        %s226 = sand.u32 %s51, 1
        %s227 = scalar_lea.sflag [#allocation6], %s226
        %s228 = sand.u32 %s51, 1
        %s229 = smul.addr %s228, 128
        %s230 = scalar_lea.vmem [#allocation5], %s229
        %p231 = pneg %p64
        %p232 = pneg %p61
        %p233 = scmp.lt.s32.totalorder %s22, 1
        %s234 = scalar_select %p233, %s22, 1
        %s235 = scalar_lea.vmem %s2, %s234
        %p236 = pneg %p90
        %p237 = pneg %p87
        %p238 = scmp.lt.s32.totalorder %s22, 1
        %s239 = scalar_select %p238, %s22, 1
        %s240 = scalar_lea.vmem %s3, %s239
        %p241 = pneg %p116
        %p242 = pneg %p113
        %p243 = pneg %p142
        %p244 = pneg %p139
        %s245 = sand.u32 %s129, 1
        %s246 = scalar_lea.sflag [#allocation4], %s245
        %s247 = sand.u32 %s129, 1
        %s248 = smul.addr %s247, 2
        %s249 = scalar_lea.vmem [#allocation7], %s248
        %p250 = scmp.lt.s32.totalorder %s22, 1
        %s251 = scalar_select %p250, %s22, 1
        %s252 = scalar_lea.vmem %s2, %s251
        %p253 = scmp.lt.s32.totalorder %s22, 1
        %s254 = scalar_select %p253, %s22, 1
        %s255 = scalar_lea.vmem %s3, %s254
        %v257 = vld [vmem:[#allocation2] sm:$0xff]
        %v259 = vcombine.high %v257, %v257
        %v261 = vunpack.c.l.s4 1983009808
        %v262 = vunpack.c.0.s8 %v261
        %v263 = vlaneseq
        %v264 = vshrl.u32 %v263, 7
        %v265 = vsub.s32 %v262, %v264
        %v266 = vrot.slane %v257, %v265
        %v268 = vunpack.c.l.s4 1983009808
        %v269 = vunpack.c.0.s8 %v268
        %v270 = vlaneseq
        %v271 = vshrl.u32 %v270, 7
        %v272 = vsub.s32 %v269, %v271
        %v273 = vrot.slane %v259, %v272
        %v274 = vcombine.high %v266, %v266
        %v275 = vcombine.high %v273, %v273
        %v280 = vpack.c.bf16 %v266, %v266
        %v281 = vpack.c.bf16 %v274, %v274
        %v282 = vpack.c.bf16 %v273, %v273
        %v283 = vpack.c.bf16 %v275, %v275
        %v284 = vld [vmem:[%s219] sm:$0xff]
        %v285 = vld [vmem:[%s219 + $0x8] sm:$0xff]
        %v286 = vld [vmem:[%s219 + $0x10] sm:$0xff]
        %v287 = vld [vmem:[%s219 + $0x18] sm:$0xff]
        %v288 = vld [vmem:[%s219 + $0x20] sm:$0xff]
        %v289 = vld [vmem:[%s219 + $0x28] sm:$0xff]
        %v290 = vld [vmem:[%s219 + $0x30] sm:$0xff]
        %v291 = vld [vmem:[%s219 + $0x38] sm:$0xff]
        %v292 = vld [vmem:[%s219 + $0x40] sm:$0xff]
        %v293 = vld [vmem:[%s219 + $0x48] sm:$0xff]
        %v294 = vld [vmem:[%s219 + $0x50] sm:$0xff]
        %v295 = vld [vmem:[%s219 + $0x58] sm:$0xff]
        %v296 = vld [vmem:[%s219 + $0x60] sm:$0xff]
        %v297 = vld [vmem:[%s219 + $0x68] sm:$0xff]
        %v298 = vld [vmem:[%s219 + $0x70] sm:$0xff]
        %v299 = vld [vmem:[%s219 + $0x78] sm:$0xff]
        %v300 = vunpack.c.l.s8.bf16 %v284
        %v301 = vunpack.c.h.s8.bf16 %v284
        %v302 = vunpack.c.l.s8.bf16 %v285
        %v303 = vunpack.c.h.s8.bf16 %v285
        %v304 = vunpack.c.l.s8.bf16 %v286
        %v305 = vunpack.c.h.s8.bf16 %v286
        %v306 = vunpack.c.l.s8.bf16 %v287
        %v307 = vunpack.c.h.s8.bf16 %v287
        %v308 = vunpack.c.l.s8.bf16 %v288
        %v309 = vunpack.c.h.s8.bf16 %v288
        %v310 = vunpack.c.l.s8.bf16 %v289
        %v311 = vunpack.c.h.s8.bf16 %v289
        %v312 = vunpack.c.l.s8.bf16 %v290
        %v313 = vunpack.c.h.s8.bf16 %v290
        %v314 = vunpack.c.l.s8.bf16 %v291
        %v315 = vunpack.c.h.s8.bf16 %v291
        %v316 = vunpack.c.l.s8.bf16 %v292
        %v317 = vunpack.c.h.s8.bf16 %v292
        %v318 = vunpack.c.l.s8.bf16 %v293
        %v319 = vunpack.c.h.s8.bf16 %v293
        %v320 = vunpack.c.l.s8.bf16 %v294
        %v321 = vunpack.c.h.s8.bf16 %v294
        %v322 = vunpack.c.l.s8.bf16 %v295
        %v323 = vunpack.c.h.s8.bf16 %v295
        %v324 = vunpack.c.l.s8.bf16 %v296
        %v325 = vunpack.c.h.s8.bf16 %v296
        %v326 = vunpack.c.l.s8.bf16 %v297
        %v327 = vunpack.c.h.s8.bf16 %v297
        %v328 = vunpack.c.l.s8.bf16 %v298
        %v329 = vunpack.c.h.s8.bf16 %v298
        %v330 = vunpack.c.l.s8.bf16 %v299
        %v331 = vunpack.c.h.s8.bf16 %v299
        %332 = vmatprep.subr.bf16.mxu0 0
        %333 = vmatpush1.bf16.msra.mxu0 %v300
        %334 = vmatprep.subr.bf16.mxu0 0
        %335 = vmatpush1.bf16.msra.mxu0 %v301
        %336 = vmatprep.subr.bf16.mxu0 0
        %337 = vmatpush1.bf16.msra.mxu0 %v302
        %338 = vmatprep.subr.bf16.mxu0 0
        %339 = vmatpush1.bf16.msra.mxu0 %v303
        %340 = vmatprep.subr.bf16.mxu0 0
        %341 = vmatpush1.bf16.msra.mxu0 %v304
        %342 = vmatprep.subr.bf16.mxu0 0
        %343 = vmatpush1.bf16.msra.mxu0 %v305
        %344 = vmatprep.subr.bf16.mxu0 0
        %345 = vmatpush1.bf16.msra.mxu0 %v306
        %346 = vmatprep.subr.bf16.mxu0 0
        %347 = vmatpush1.bf16.msra.mxu0 %v307
        %348 = vmatprep.subr.bf16.mxu0 0
        %349 = vmatpush1.bf16.msra.mxu0 %v308
        %350 = vmatprep.subr.bf16.mxu0 0
        %351 = vmatpush1.bf16.msra.mxu0 %v309
        %352 = vmatprep.subr.bf16.mxu0 0
        %353 = vmatpush1.bf16.msra.mxu0 %v310
        %354 = vmatprep.subr.bf16.mxu0 0
        %355 = vmatpush1.bf16.msra.mxu0 %v311
        %356 = vmatprep.subr.bf16.mxu0 0
        %357 = vmatpush1.bf16.msra.mxu0 %v312
        %358 = vmatprep.subr.bf16.mxu0 0
        %359 = vmatpush1.bf16.msra.mxu0 %v313
        %360 = vmatprep.subr.bf16.mxu0 0
        %361 = vmatpush1.bf16.msra.mxu0 %v314
        %362 = vmatprep.subr.bf16.mxu0 0
        %363 = vmatpush1.bf16.msra.mxu0 %v315
        %364 = vmatprep.mubr.bf16.mxu0 %v281
        %365 = vmatmul.mubr.bf16.gmra.mrb[0].mxu0 %v280
        %v366 = vpop.f32.mrb[0].mxu0
        %v367 = vadd.f32 0.0, %v366
        %v368 = vpop.f32.mrb[0].mxu0
        %v369 = vpop.f32.mrb[0].mxu0
        %v370 = vpop.f32.mrb[0].mxu0
        %371 = vdwg.mxu0
        %372 = vmatprep.subr.bf16.mxu0 0
        %373 = vmatpush1.bf16.msra.mxu0 %v316
        %374 = vmatprep.subr.bf16.mxu0 0
        %375 = vmatpush1.bf16.msra.mxu0 %v317
        %376 = vmatprep.subr.bf16.mxu0 0
        %377 = vmatpush1.bf16.msra.mxu0 %v318
        %378 = vmatprep.subr.bf16.mxu0 0
        %379 = vmatpush1.bf16.msra.mxu0 %v319
        %380 = vmatprep.subr.bf16.mxu0 0
        %381 = vmatpush1.bf16.msra.mxu0 %v320
        %382 = vmatprep.subr.bf16.mxu0 0
        %383 = vmatpush1.bf16.msra.mxu0 %v321
        %384 = vmatprep.subr.bf16.mxu0 0
        %385 = vmatpush1.bf16.msra.mxu0 %v322
        %386 = vmatprep.subr.bf16.mxu0 0
        %387 = vmatpush1.bf16.msra.mxu0 %v323
        %388 = vmatprep.subr.bf16.mxu0 0
        %389 = vmatpush1.bf16.msra.mxu0 %v324
        %390 = vmatprep.subr.bf16.mxu0 0
        %391 = vmatpush1.bf16.msra.mxu0 %v325
        %392 = vmatprep.subr.bf16.mxu0 0
        %393 = vmatpush1.bf16.msra.mxu0 %v326
        %394 = vmatprep.subr.bf16.mxu0 0
        %395 = vmatpush1.bf16.msra.mxu0 %v327
        %396 = vmatprep.subr.bf16.mxu0 0
        %397 = vmatpush1.bf16.msra.mxu0 %v328
        %398 = vmatprep.subr.bf16.mxu0 0
        %399 = vmatpush1.bf16.msra.mxu0 %v329
        %400 = vmatprep.subr.bf16.mxu0 0
        %401 = vmatpush1.bf16.msra.mxu0 %v330
        %402 = vmatprep.subr.bf16.mxu0 0
        %403 = vmatpush1.bf16.msra.mxu0 %v331
        %404 = vmatprep.mubr.bf16.mxu0 %v283
        %405 = vmatmul.mubr.bf16.gmra.mrb[0].mxu0 %v282
        %v406 = vpop.f32.mrb[0].mxu0
        %v407 = vadd.f32 %v367, %v406
        %v408 = vpop.f32.mrb[0].mxu0
        %v409 = vpop.f32.mrb[0].mxu0
        %v410 = vpop.f32.mrb[0].mxu0
        %411 = vdwg.mxu0
        %v412 = vld [vmem:[%s252] sm:$0x1]
        %v414 = vlaneseq
        %v415 = vshrl.u32 %v414, 7
        %v416 = vsub.s32 0, %v415
        %v417 = vrot.slane %v412, %v416
        %v419 = vmul.f32 %v407, %v417
        %v420 = vld [vmem:[%s255] sm:$0x1]
        %v422 = vlaneseq
        %v423 = vshrl.u32 %v422, 7
        %v424 = vsub.s32 0, %v423
        %v425 = vrot.slane %v420, %v424
        %v427 = vadd.f32 %v419, %v425
        %428 = vst [vmem:[%s249] sm:$0x3] %v427
        %s429 = sand.u32 %s129, 1
        %s430 = scalar_lea.sflag [#allocation4], %s429
        %s431 = sand.u32 %s129, 1
        %s432 = smul.addr %s431, 2
        %s433 = scalar_lea.vmem [#allocation7], %s432
        // Predicated region
        $region45: #{tpu_custom_call.1} parent=35 // pred_check
          %p434 = pneg %p139
        $region46: #{tpu_custom_call.1} parent=35 // pred_check_branch
          %436 = sbr.rel (%p434) target = $region48
        $region47: #{tpu_custom_call.1} parent=35 // pred_region
          %s438 = ssub.s32 32, 32
          %439 = vsyncadd %s430, %s438
          %s440 = smul.addr %s22, 32
          %s441 = scalar_lea.hbm %s4, %s440
          %s443 = sshll.u32 %s433, 4
          %s444 = int_to_ptr.vmem [resolvable:$true] %s443
          %446 = dma.vmem_to_hbm [thread:$0]  %s444, 32, %s441, %s430
        $region48: #{tpu_custom_call.1} parent=35 // pred_fallthru
          _
      $region36: #{tpu_custom_call.1} parent=5 // pred_fallthru
        _
      %p447 = scmp.le.s32.totalorder 2, %s17
      // Predicated region
      $region49: #{tpu_custom_call.1} parent=5 // pred_check
        %p448 = pneg %p447
      $region50: #{tpu_custom_call.1} parent=5 // pred_check_branch
        %450 = sbr.rel (%p448) target = $region52
      $region51: #{tpu_custom_call.1} parent=5 // pred_region
        %s451 = ssub.s32 %s17, 2
        // Predicated region
        $region53: #{tpu_custom_call.1} parent=51 // pred_check
          %p452 = pneg %p145
        $region54: #{tpu_custom_call.1} parent=51 // pred_check_branch
          %454 = sbr.rel (%p452) target = $region56
        $region55: #{tpu_custom_call.1} parent=51 // pred_region
          %s455 = sand.u32 %s130, 1
          %s456 = scalar_lea.sflag [#allocation4], %s455
          %s457 = sand.u32 %s130, 1
          %s458 = smul.addr %s457, 2
          %s459 = scalar_lea.vmem [#allocation7], %s458
          %460 = dma.done %s456, 32
        $region56: #{tpu_custom_call.1} parent=51 // pred_fallthru
          _
      $region52: #{tpu_custom_call.1} parent=5 // pred_fallthru
        _
    $region6: #{tpu_custom_call.1} parent=1 // loop_footer
      %s21 = sadd.s32 1, %s17
    $region7: #{tpu_custom_call.1} parent=1 // loop_footer_branch
      %16 = sbr.rel target = $region3
    $region8: #{tpu_custom_call.1} parent=1 // loop_exit
      _
    %461 = vsyncpa [#allocation3], 1
    %s462 = scalar_lea.sflag [#allocation3], 1
    %463 = vsyncpa %s462, 1
    %464 = vsyncpa [#allocation6], 1
    %s465 = scalar_lea.sflag [#allocation6], 1
    %466 = vsyncpa %s465, 1
    %467 = vsyncpa [#allocation4], 1
    %s468 = scalar_lea.sflag [#allocation4], 1
    %469 = vsyncpa %s468, 1

</llo_original>
